<compile_context>
chip_gen: v6e
topology: v6e:2x2x1
jax: 0.10.0
libtpu: 0.0.40
codegen_flags: <defaults>
</compile_context>

<pallas_src>
import functools

import jax
import jax.numpy as jnp
from jax.experimental import pallas as pl
from jax.experimental.pallas import tpu as pltpu


def _round_up(n, m):
    return ((n + m - 1) // m) * m


def actor_kernel(x_ref, w1_ref, b1_ref, w2_ref, b2_ref, w3_ref, b3_ref,
                 o_ref, xpad_ref):
    # In-kernel zero-pad + bf16 cast of the (batch, state_dim) f32 input into
    # the MXU-friendly (b_pad, 128) shape (padding is mathematically inert).
    batch, state_dim = x_ref.shape
    xpad_ref[...] = jnp.zeros_like(xpad_ref)
    xpad_ref[0:batch, 0:state_dim] = x_ref[...]
    xb = xpad_ref[...].astype(jnp.bfloat16)

    # Layer 1: Linear(state -> 512pad) + ReLU.  bf16 operands, f32 accumulate.
    h1 = jnp.dot(xb, w1_ref[...], preferred_element_type=jnp.float32)
    h1 = jnp.maximum(h1 + b1_ref[...], 0.0)

    # Layer 2: Linear(512pad -> 384pad) + ReLU.
    h2 = jnp.dot(h1.astype(jnp.bfloat16), w2_ref[...],
                 preferred_element_type=jnp.float32)
    h2 = jnp.maximum(h2 + b2_ref[...], 0.0)

    # Layer 3: Linear(384pad -> 128pad) + Sigmoid.
    h3 = jnp.dot(h2.astype(jnp.bfloat16), w3_ref[...],
                 preferred_element_type=jnp.float32)
    h3 = h3 + b3_ref[...]
    # sigmoid(h) = 0.5 * tanh(0.5 * h) + 0.5 : single EUP op + one VPU FMA.
    o_ref[...] = (0.5 * jnp.tanh(0.5 * h3) + 0.5).astype(o_ref.dtype)


def init_actor_params(key, state_dim, action_dim):
    """PyTorch nn.Linear default init (U[-1/sqrt(fan_in), 1/sqrt(fan_in)]).

    Stored as (in_features, out_features) so forward is x @ W + b
    (equivalent to PyTorch's x @ W.T with its (out, in) storage)."""
    ks = jax.random.split(key, 6)

    def linear(kw, kb, fan_in, fan_out):
        bound = 1.0 / jnp.sqrt(float(fan_in))
        w = jax.random.uniform(kw, (fan_in, fan_out), jnp.float32, -bound, bound)
        b = jax.random.uniform(kb, (1, fan_out), jnp.float32, -bound, bound)
        return w, b

    w1, b1 = linear(ks[0], ks[1], state_dim, 400)
    w2, b2 = linear(ks[2], ks[3], 400, 300)
    w3, b3 = linear(ks[4], ks[5], 300, action_dim)
    return (w1, b1, w2, b2, w3, b3)


def prepare_actor_params(params):
    """One-time pad (to multiples of 128) + cast weights to bf16; biases f32."""
    w1, b1, w2, b2, w3, b3 = params
    p_in = _round_up(w1.shape[0], 128)   # state_dim -> 128
    p_h1 = _round_up(w1.shape[1], 128)   # 400 -> 512
    p_h2 = _round_up(w2.shape[1], 128)   # 300 -> 384
    p_out = _round_up(w3.shape[1], 128)  # action_dim -> 128

    def pad2(a, rows, cols):
        return jnp.zeros((rows, cols), a.dtype).at[:a.shape[0], :a.shape[1]].set(a)

    w1p = pad2(w1, p_in, p_h1).astype(jnp.bfloat16)
    w2p = pad2(w2, p_h1, p_h2).astype(jnp.bfloat16)
    w3p = pad2(w3, p_h2, p_out).astype(jnp.bfloat16)
    b1p = pad2(b1, 1, p_h1)   # f32 epilogue
    b2p = pad2(b2, 1, p_h2)
    b3p = pad2(b3, 1, p_out)
    return (w1p, b1p, w2p, b2p, w3p, b3p)


@functools.partial(jax.jit, static_argnames=("action_dim",))
def actor_forward(x, prepared_params, action_dim):
    w1, b1, w2, b2, w3, b3 = prepared_params
    batch, state_dim = x.shape
    p_in, p_h1 = w1.shape
    p_h2 = w2.shape[1]
    p_out = w3.shape[1]
    b_pad = max(16, _round_up(batch, 16))  # bf16 sublane pack = 16 rows/vreg

    flops = 2 * b_pad * (p_in * p_h1 + p_h1 * p_h2 + p_h2 * p_out)
    bytes_accessed = (
        batch * state_dim * 4                                   # x (f32)
        + 2 * (p_in * p_h1 + p_h1 * p_h2 + p_h2 * p_out)        # weights (bf16)
        + 4 * (p_h1 + p_h2 + p_out)                             # biases (f32)
        + b_pad * p_out * 4                                     # output (f32)
    )

    # Whole padded working set (~0.7 MB) fits VMEM: full-array blocks, no grid.
    vmem_spec = pl.BlockSpec(memory_space=pltpu.MemorySpace.VMEM)
    out_pad = pl.pallas_call(
        actor_kernel,
        out_shape=jax.ShapeDtypeStruct((b_pad, p_out), jnp.float32),
        in_specs=[vmem_spec] * 7,
        out_specs=vmem_spec,
        scratch_shapes=[pltpu.VMEM((b_pad, p_in), jnp.float32)],
        cost_estimate=pl.CostEstimate(
            flops=flops,
            transcendentals=b_pad * p_out,       # tanh epilogue
            bytes_accessed=bytes_accessed,
        ),
    )(x, w1, b1, w2, b2, w3, b3)
    return out_pad[:batch, :action_dim]


if __name__ == "__main__":
    state_dim, action_dim, batch = 16, 4, 2

    key = jax.random.PRNGKey(0)
    k_params, k_x = jax.random.split(key)
    params = init_actor_params(k_params, state_dim, action_dim)
    prepared = prepare_actor_params(params)
    x = jax.random.normal(k_x, (batch, state_dim), jnp.float32)

    out = actor_forward(x, prepared, action_dim)
    out = jax.block_until_ready(out)

    # Pure-JAX f32 reference with the unquantized weights; tolerance covers the
    # bf16 weight/activation quantization in the kernel.
    w1, b1, w2, b2, w3, b3 = params
    ref = jax.nn.sigmoid(
        jnp.maximum(jnp.maximum(x @ w1 + b1, 0.0) @ w2 + b2, 0.0) @ w3 + b3
    )
    assert out.shape == (batch, action_dim)
    assert jnp.allclose(out, ref, atol=2e-2, rtol=2e-2)

    print("KERNEL_OK")
</pallas_src>

<mosaic_0001>
module attributes {stable_mosaic.version = 11 : i64} {
  func.func @actor_kernel(%arg0: memref<2x16xf32, #tpu.memory_space<vmem>>, %arg1: memref<128x512xbf16, #tpu.memory_space<vmem>>, %arg2: memref<1x512xf32, #tpu.memory_space<vmem>>, %arg3: memref<512x384xbf16, #tpu.memory_space<vmem>>, %arg4: memref<1x384xf32, #tpu.memory_space<vmem>>, %arg5: memref<384x128xbf16, #tpu.memory_space<vmem>>, %arg6: memref<1x128xf32, #tpu.memory_space<vmem>>, %arg7: memref<16x128xf32, #tpu.memory_space<vmem>>, %arg8: memref<16x128xf32, #tpu.memory_space<vmem>>) attributes {dimension_semantics = [], scalar_prefetch = 0 : i64, scratch_operands = 1 : i64, tpu.core_type = #tpu.core_type<tc>} {
    %cst = arith.constant 0.000000e+00 : f32
    %0 = vector.broadcast %cst : f32 to vector<16x128xf32>
    %c0 = arith.constant 0 : index
    %c0_0 = arith.constant 0 : index
    %1 = vector.load %arg8[%c0, %c0_0] : memref<16x128xf32, #tpu.memory_space<vmem>>, vector<16x128xf32>
    tpu.vector_store %arg8[%c0, %c0_0], %0 {strides = array<i32>} : memref<16x128xf32, #tpu.memory_space<vmem>>, vector<16x128xf32>,
    %c0_1 = arith.constant 0 : index
    %c0_2 = arith.constant 0 : index
    %2 = vector.load %arg0[%c0_1, %c0_2] : memref<2x16xf32, #tpu.memory_space<vmem>>, vector<2x16xf32>
    %c0_3 = arith.constant 0 : index
    %c0_4 = arith.constant 0 : index
    %3 = vector.load %arg8[%c0_3, %c0_4] : memref<16x128xf32, #tpu.memory_space<vmem>>, vector<2x16xf32>
    tpu.vector_store %arg8[%c0_3, %c0_4], %2 {strides = array<i32>} : memref<16x128xf32, #tpu.memory_space<vmem>>, vector<2x16xf32>,
    %c0_5 = arith.constant 0 : index
    %c0_6 = arith.constant 0 : index
    %4 = vector.load %arg8[%c0_5, %c0_6] : memref<16x128xf32, #tpu.memory_space<vmem>>, vector<16x128xf32>
    %5 = arith.truncf %4 : vector<16x128xf32> to vector<16x128xbf16>
    %c0_7 = arith.constant 0 : index
    %c0_8 = arith.constant 0 : index
    %6 = vector.load %arg1[%c0_7, %c0_8] : memref<128x512xbf16, #tpu.memory_space<vmem>>, vector<128x512xbf16>
    %cst_9 = arith.constant dense<0.000000e+00> : vector<16x512xf32>
    %7 = tpu.matmul %5, %6, %cst_9 {dimension_numbers = #tpu.dot_dimension_numbers<[1], [0], [0], [1], [0, 0, 1, 1], [], []>} : vector<16x128xbf16>, vector<128x512xbf16>, vector<16x512xf32> -> vector<16x512xf32>
    %c0_10 = arith.constant 0 : index
    %c0_11 = arith.constant 0 : index
    %8 = vector.load %arg2[%c0_10, %c0_11] : memref<1x512xf32, #tpu.memory_space<vmem>>, vector<1x512xf32>
    %9 = vector.broadcast %8 : vector<1x512xf32> to vector<16x512xf32>
    %10 = arith.addf %7, %9 : vector<16x512xf32>
    %cst_12 = arith.constant 0.000000e+00 : f32
    %11 = vector.broadcast %cst_12 : f32 to vector<16x512xf32>
    %12 = arith.maximumf %10, %11 : vector<16x512xf32>
    %13 = arith.truncf %12 : vector<16x512xf32> to vector<16x512xbf16>
    %c0_13 = arith.constant 0 : index
    %c0_14 = arith.constant 0 : index
    %14 = vector.load %arg3[%c0_13, %c0_14] : memref<512x384xbf16, #tpu.memory_space<vmem>>, vector<512x384xbf16>
    %cst_15 = arith.constant dense<0.000000e+00> : vector<16x384xf32>
    %15 = tpu.matmul %13, %14, %cst_15 {dimension_numbers = #tpu.dot_dimension_numbers<[1], [0], [0], [1], [0, 0, 1, 1], [], []>} : vector<16x512xbf16>, vector<512x384xbf16>, vector<16x384xf32> -> vector<16x384xf32>
    %c0_16 = arith.constant 0 : index
    %c0_17 = arith.constant 0 : index
    %16 = vector.load %arg4[%c0_16, %c0_17] : memref<1x384xf32, #tpu.memory_space<vmem>>, vector<1x384xf32>
    %17 = vector.broadcast %16 : vector<1x384xf32> to vector<16x384xf32>
    %18 = arith.addf %15, %17 : vector<16x384xf32>
    %cst_18 = arith.constant 0.000000e+00 : f32
    %19 = vector.broadcast %cst_18 : f32 to vector<16x384xf32>
    %20 = arith.maximumf %18, %19 : vector<16x384xf32>
    %21 = arith.truncf %20 : vector<16x384xf32> to vector<16x384xbf16>
    %c0_19 = arith.constant 0 : index
    %c0_20 = arith.constant 0 : index
    %22 = vector.load %arg5[%c0_19, %c0_20] : memref<384x128xbf16, #tpu.memory_space<vmem>>, vector<384x128xbf16>
    %cst_21 = arith.constant dense<0.000000e+00> : vector<16x128xf32>
    %23 = tpu.matmul %21, %22, %cst_21 {dimension_numbers = #tpu.dot_dimension_numbers<[1], [0], [0], [1], [0, 0, 1, 1], [], []>} : vector<16x384xbf16>, vector<384x128xbf16>, vector<16x128xf32> -> vector<16x128xf32>
    %c0_22 = arith.constant 0 : index
    %c0_23 = arith.constant 0 : index
    %24 = vector.load %arg6[%c0_22, %c0_23] : memref<1x128xf32, #tpu.memory_space<vmem>>, vector<1x128xf32>
    %25 = vector.broadcast %24 : vector<1x128xf32> to vector<16x128xf32>
    %26 = arith.addf %23, %25 : vector<16x128xf32>
    %cst_24 = arith.constant 5.000000e-01 : f32
    %27 = vector.broadcast %cst_24 : f32 to vector<16x128xf32>
    %28 = arith.mulf %27, %26 : vector<16x128xf32>
    %29 = math.tanh %28 : vector<16x128xf32>
    %cst_25 = arith.constant 5.000000e-01 : f32
    %30 = vector.broadcast %cst_25 : f32 to vector<16x128xf32>
    %31 = arith.mulf %30, %29 : vector<16x128xf32>
    %cst_26 = arith.constant 5.000000e-01 : f32
    %32 = vector.broadcast %cst_26 : f32 to vector<16x128xf32>
    %33 = arith.addf %31, %32 : vector<16x128xf32>
    %c0_27 = arith.constant 0 : index
    %c0_28 = arith.constant 0 : index
    %34 = vector.load %arg7[%c0_27, %c0_28] : memref<16x128xf32, #tpu.memory_space<vmem>>, vector<16x128xf32>
    tpu.vector_store %arg7[%c0_27, %c0_28], %33 {strides = array<i32>} : memref<16x128xf32, #tpu.memory_space<vmem>>, vector<16x128xf32>,
    return
  }
}

</mosaic_0001>

<llo_original>
// kernel: actor_forward.1
$region0: #{actor_forward.1}
  #allocation0 [shape = 'u32[]', space=smem, size = 0x4, offset = 0x4, fixed_abs, tag = 'smem constant byte address 0x4 - core index']
  #allocation1 [shape = 'u32[144,128]{1,0:T(1,128)}', space=vmem, size = 0x12000, scoped, tag = 'internal scratch']
  #allocation2 [shape = 'f32[16,128]{1,0:T(8,128)}', space=vmem, size = 0x2000, scoped, tag = 'scratch operand']
  %s0 = inlined_call_operand.hbm [shape: f32[2,16], index: 0, kind: input, shape index: {}]
  %s1 = inlined_call_operand.hbm [shape: bf16[128,512], index: 1, kind: input, shape index: {}]
  %s2 = inlined_call_operand.hbm [shape: f32[1,512], index: 2, kind: input, shape index: {}]
  %s3 = inlined_call_operand.hbm [shape: bf16[512,384], index: 3, kind: input, shape index: {}]
  %s4 = inlined_call_operand.vmem [shape: f32[1,384], index: 4, kind: input, shape index: {}]
  %s5 = inlined_call_operand.hbm [shape: bf16[384,128], index: 5, kind: input, shape index: {}]
  %s6 = inlined_call_operand.vmem [shape: f32[1,128], index: 6, kind: input, shape index: {}]
  %s7 = inlined_call_operand.vmem [shape: f32[16,128], index: 7, kind: output, shape index: {}]
  %s8 = sld [smem:[#allocation0]]
  $region58: #{actor_forward.1} parent=0
    _
  %s10 = ssub.s32 1, %s8
  %s11 = scalar_select 0, %s10, %s8
  $region1: #{actor_forward.1} parent=0
    #allocation3 [shape = 'u8[1024]{0}', space=vmem, size = 0x400, scoped, tag = 'input window, operand 0, single buffered']
    #allocation4 [shape = 's32[1]{0}', space=sflag, size = 0x4, scoped, tag = 'scoped memory for actor_forward.1']
    #allocation5 [shape = 'u8[131072]{0}', space=vmem, size = 0x20000, scoped, tag = 'input window, operand 1, single buffered']
    #allocation6 [shape = 's32[1]{0}', space=sflag, size = 0x4, scoped, tag = 'scoped memory for actor_forward.1']
    #allocation7 [shape = 'u8[2048]{0}', space=vmem, size = 0x800, scoped, tag = 'input window, operand 2, single buffered']
    #allocation8 [shape = 'u8[393216]{0}', space=vmem, size = 0x60000, scoped, tag = 'input window, operand 3, single buffered']
    #allocation9 [shape = 's32[1]{0}', space=sflag, size = 0x4, scoped, tag = 'scoped memory for actor_forward.1']
    #allocation10 [shape = 'u8[98304]{0}', space=vmem, size = 0x18000, scoped, tag = 'input window, operand 5, single buffered']
    %12 = vsyncpa [#allocation4], 0
    %13 = vsyncpa [#allocation6], 0
    %14 = vsyncpa [#allocation9], 0
    // Predicated region
    $region2: #{actor_forward.1} parent=1 // pred_check
      _
    $region3: #{actor_forward.1} parent=1 // pred_check_branch
      %16 = sbr.rel (0) target = $region5
    $region4: #{actor_forward.1} parent=1 // pred_region
      %s18 = ssub.s32 32, 32
      %19 = vsyncadd [#allocation4], %s18
      %s21 = sshll.u32 [#allocation3], 4
      %s22 = int_to_ptr.vmem [resolvable:$true] %s21
      %24 = dma.hbm_to_vmem [thread:$0]  %s0, 32, %s22, [#allocation4]
    $region5: #{actor_forward.1} parent=1 // pred_fallthru
      _
    // Predicated region
    $region6: #{actor_forward.1} parent=1 // pred_check
      _
    $region7: #{actor_forward.1} parent=1 // pred_check_branch
      %26 = sbr.rel (0) target = $region9
    $region8: #{actor_forward.1} parent=1 // pred_region
      %s28 = ssub.s32 4096, 4096
      %29 = vsyncadd [#allocation6], %s28
      %s30 = sshll.u32 [#allocation5], 4
      %s31 = int_to_ptr.vmem [resolvable:$true] %s30
      %36 = dma.hbm_to_vmem [thread:$0]  %s1, 4096, %s31, [#allocation6], 256, 256, 16
    $region9: #{actor_forward.1} parent=1 // pred_fallthru
      _
    // Predicated region
    $region10: #{actor_forward.1} parent=1 // pred_check
      _
    $region11: #{actor_forward.1} parent=1 // pred_check_branch
      %38 = sbr.rel (0) target = $region13
    $region12: #{actor_forward.1} parent=1 // pred_region
      %s40 = ssub.s32 64, 64
      %41 = vsyncadd [#allocation6], %s40
      %s43 = sshll.u32 [#allocation7], 4
      %s44 = int_to_ptr.vmem [resolvable:$true] %s43
      %46 = dma.hbm_to_vmem [thread:$0]  %s2, 64, %s44, [#allocation6]
    $region13: #{actor_forward.1} parent=1 // pred_fallthru
      _
    // Predicated region
    $region14: #{actor_forward.1} parent=1 // pred_check
      _
    $region15: #{actor_forward.1} parent=1 // pred_check_branch
      %48 = sbr.rel (0) target = $region17
    $region16: #{actor_forward.1} parent=1 // pred_region
      %s50 = ssub.s32 12288, 12288
      %51 = vsyncadd [#allocation9], %s50
      %s52 = sshll.u32 [#allocation8], 4
      %s53 = int_to_ptr.vmem [resolvable:$true] %s52
      %58 = dma.hbm_to_vmem [thread:$0]  %s3, 12288, %s53, [#allocation9], 192, 192, 12
    $region17: #{actor_forward.1} parent=1 // pred_fallthru
      _
    // Predicated region
    $region18: #{actor_forward.1} parent=1 // pred_check
      _
    $region19: #{actor_forward.1} parent=1 // pred_check_branch
      %60 = sbr.rel (0) target = $region21
    $region20: #{actor_forward.1} parent=1 // pred_region
      _
    $region21: #{actor_forward.1} parent=1 // pred_fallthru
      _
    // Predicated region
    $region22: #{actor_forward.1} parent=1 // pred_check
      _
    $region23: #{actor_forward.1} parent=1 // pred_check_branch
      %62 = sbr.rel (0) target = $region25
    $region24: #{actor_forward.1} parent=1 // pred_region
      %s64 = ssub.s32 3072, 3072
      %65 = vsyncadd [#allocation9], %s64
      %s66 = sshll.u32 [#allocation10], 4
      %s67 = int_to_ptr.vmem [resolvable:$true] %s66
      %72 = dma.hbm_to_vmem [thread:$0]  %s5, 3072, %s67, [#allocation9], 64, 64, 4
    $region25: #{actor_forward.1} parent=1 // pred_fallthru
      _
    // Predicated region
    $region26: #{actor_forward.1} parent=1 // pred_check
      _
    $region27: #{actor_forward.1} parent=1 // pred_check_branch
      %74 = sbr.rel (0) target = $region29
    $region28: #{actor_forward.1} parent=1 // pred_region
      _
    $region29: #{actor_forward.1} parent=1 // pred_fallthru
      _
    // Predicated region
    $region30: #{actor_forward.1} parent=1 // pred_check
      _
    $region31: #{actor_forward.1} parent=1 // pred_check_branch
      %76 = sbr.rel (0) target = $region33
    $region32: #{actor_forward.1} parent=1 // pred_region
      %77 = dma.done [#allocation4], 32
    $region33: #{actor_forward.1} parent=1 // pred_fallthru
      _
    // Predicated region
    $region34: #{actor_forward.1} parent=1 // pred_check
      _
    $region35: #{actor_forward.1} parent=1 // pred_check_branch
      %79 = sbr.rel (0) target = $region37
    $region36: #{actor_forward.1} parent=1 // pred_region
      %80 = dma.done [#allocation6], 4096
    $region37: #{actor_forward.1} parent=1 // pred_fallthru
      _
    // Predicated region
    $region38: #{actor_forward.1} parent=1 // pred_check
      _
    $region39: #{actor_forward.1} parent=1 // pred_check_branch
      %82 = sbr.rel (0) target = $region41
    $region40: #{actor_forward.1} parent=1 // pred_region
      %83 = dma.done [#allocation6], 64
    $region41: #{actor_forward.1} parent=1 // pred_fallthru
      _
    // Predicated region
    $region42: #{actor_forward.1} parent=1 // pred_check
      _
    $region43: #{actor_forward.1} parent=1 // pred_check_branch
      %85 = sbr.rel (0) target = $region45
    $region44: #{actor_forward.1} parent=1 // pred_region
      %86 = dma.done [#allocation9], 12288
    $region45: #{actor_forward.1} parent=1 // pred_fallthru
      _
    // Predicated region
    $region46: #{actor_forward.1} parent=1 // pred_check
      _
    $region47: #{actor_forward.1} parent=1 // pred_check_branch
      %88 = sbr.rel (0) target = $region49
    $region48: #{actor_forward.1} parent=1 // pred_region
      %89 = dma.done [#allocation9], 3072
    $region49: #{actor_forward.1} parent=1 // pred_fallthru
      _
    %91 = vst [vmem:[#allocation2] sm:$0xff] 0.0
    %92 = vst [vmem:[#allocation2 + $0x8] sm:$0xff] 0.0
    %v93 = vld [vmem:[#allocation3] sm:$0x3]
    %vm94 = vcmask 123904
    %95 = vst.msk [vmem:[#allocation2] sm:$0x3] %vm94, %v93
    %v96 = vld [vmem:[#allocation2] sm:$0xff]
    %v97 = vld [vmem:[#allocation2 + $0x8] sm:$0xff]
    %v98 = vpack.c.bf16 %v97, %v96
    %v99 = vld [vmem:[#allocation5] sm:$0xff]
    %v100 = vld [vmem:[#allocation5 + $0x8] sm:$0xff]
    %v101 = vld [vmem:[#allocation5 + $0x10] sm:$0xff]
    %v102 = vld [vmem:[#allocation5 + $0x18] sm:$0xff]
    %v103 = vld [vmem:[#allocation5 + $0x20] sm:$0xff]
    %v104 = vld [vmem:[#allocation5 + $0x28] sm:$0xff]
    %v105 = vld [vmem:[#allocation5 + $0x30] sm:$0xff]
    %v106 = vld [vmem:[#allocation5 + $0x38] sm:$0xff]
    %v107 = vld [vmem:[#allocation5 + $0x40] sm:$0xff]
    %v108 = vld [vmem:[#allocation5 + $0x48] sm:$0xff]
    %v109 = vld [vmem:[#allocation5 + $0x50] sm:$0xff]
    %v110 = vld [vmem:[#allocation5 + $0x58] sm:$0xff]
    %v111 = vld [vmem:[#allocation5 + $0x60] sm:$0xff]
    %v112 = vld [vmem:[#allocation5 + $0x68] sm:$0xff]
    %v113 = vld [vmem:[#allocation5 + $0x70] sm:$0xff]
    %v114 = vld [vmem:[#allocation5 + $0x78] sm:$0xff]
    %v115 = vld [vmem:[#allocation5 + $0x80] sm:$0xff]
    %v116 = vld [vmem:[#allocation5 + $0x88] sm:$0xff]
    %v117 = vld [vmem:[#allocation5 + $0x90] sm:$0xff]
    %v118 = vld [vmem:[#allocation5 + $0x98] sm:$0xff]
    %v119 = vld [vmem:[#allocation5 + $0xa0] sm:$0xff]
    %v120 = vld [vmem:[#allocation5 + $0xa8] sm:$0xff]
    %v121 = vld [vmem:[#allocation5 + $0xb0] sm:$0xff]
    %v122 = vld [vmem:[#allocation5 + $0xb8] sm:$0xff]
    %v123 = vld [vmem:[#allocation5 + $0xc0] sm:$0xff]
    %v124 = vld [vmem:[#allocation5 + $0xc8] sm:$0xff]
    %v125 = vld [vmem:[#allocation5 + $0xd0] sm:$0xff]
    %v126 = vld [vmem:[#allocation5 + $0xd8] sm:$0xff]
    %v127 = vld [vmem:[#allocation5 + $0xe0] sm:$0xff]
    %v128 = vld [vmem:[#allocation5 + $0xe8] sm:$0xff]
    %v129 = vld [vmem:[#allocation5 + $0xf0] sm:$0xff]
    %v130 = vld [vmem:[#allocation5 + $0xf8] sm:$0xff]
    %v131 = vld [vmem:[#allocation7] sm:$0xf]
    %v133 = vlaneseq
    %v134 = vshrl.u32 %v133, 7
    %v135 = vsub.s32 0, %v134
    %v136 = vrot.slane %v131, %v135
    %v137 = vlaneseq
    %v138 = vshrl.u32 %v137, 7
    %v139 = vsub.s32 1, %v138
    %v140 = vrot.slane %v131, %v139
    %v141 = vlaneseq
    %v142 = vshrl.u32 %v141, 7
    %v143 = vsub.s32 2, %v142
    %v144 = vrot.slane %v131, %v143
    %v145 = vlaneseq
    %v146 = vshrl.u32 %v145, 7
    %v147 = vsub.s32 3, %v146
    %v148 = vrot.slane %v131, %v147
    %v185 = vunpack.c.l.b16 %v99
    %v186 = vunpack.c.h.b16 %v99
    %v187 = vunpack.c.l.b16 %v100
    %v188 = vunpack.c.h.b16 %v100
    %v189 = vunpack.c.l.b16 %v101
    %v190 = vunpack.c.h.b16 %v101
    %v191 = vunpack.c.l.b16 %v102
    %v192 = vunpack.c.h.b16 %v102
    %v193 = vunpack.c.l.b16 %v103
    %v194 = vunpack.c.h.b16 %v103
    %v195 = vunpack.c.l.b16 %v104
    %v196 = vunpack.c.h.b16 %v104
    %v197 = vunpack.c.l.b16 %v105
    %v198 = vunpack.c.h.b16 %v105
    %v199 = vunpack.c.l.b16 %v106
    %v200 = vunpack.c.h.b16 %v106
    %v201 = vunpack.c.l.b16 %v107
    %v202 = vunpack.c.h.b16 %v107
    %v203 = vunpack.c.l.b16 %v108
    %v204 = vunpack.c.h.b16 %v108
    %v205 = vunpack.c.l.b16 %v109
    %v206 = vunpack.c.h.b16 %v109
    %v207 = vunpack.c.l.b16 %v110
    %v208 = vunpack.c.h.b16 %v110
    %v209 = vunpack.c.l.b16 %v111
    %v210 = vunpack.c.h.b16 %v111
    %v211 = vunpack.c.l.b16 %v112
    %v212 = vunpack.c.h.b16 %v112
    %v213 = vunpack.c.l.b16 %v113
    %v214 = vunpack.c.h.b16 %v113
    %v215 = vunpack.c.l.b16 %v114
    %v216 = vunpack.c.h.b16 %v114
    %v217 = vunpack.c.l.b16 %v115
    %v218 = vunpack.c.h.b16 %v115
    %v219 = vunpack.c.l.b16 %v116
    %v220 = vunpack.c.h.b16 %v116
    %v221 = vunpack.c.l.b16 %v117
    %v222 = vunpack.c.h.b16 %v117
    %v223 = vunpack.c.l.b16 %v118
    %v224 = vunpack.c.h.b16 %v118
    %v225 = vunpack.c.l.b16 %v119
    %v226 = vunpack.c.h.b16 %v119
    %v227 = vunpack.c.l.b16 %v120
    %v228 = vunpack.c.h.b16 %v120
    %v229 = vunpack.c.l.b16 %v121
    %v230 = vunpack.c.h.b16 %v121
    %v231 = vunpack.c.l.b16 %v122
    %v232 = vunpack.c.h.b16 %v122
    %v233 = vunpack.c.l.b16 %v123
    %v234 = vunpack.c.h.b16 %v123
    %v235 = vunpack.c.l.b16 %v124
    %v236 = vunpack.c.h.b16 %v124
    %v237 = vunpack.c.l.b16 %v125
    %v238 = vunpack.c.h.b16 %v125
    %v239 = vunpack.c.l.b16 %v126
    %v240 = vunpack.c.h.b16 %v126
    %v241 = vunpack.c.l.b16 %v127
    %v242 = vunpack.c.h.b16 %v127
    %v243 = vunpack.c.l.b16 %v128
    %v244 = vunpack.c.h.b16 %v128
    %v245 = vunpack.c.l.b16 %v129
    %v246 = vunpack.c.h.b16 %v129
    %v247 = vunpack.c.l.b16 %v130
    %v248 = vunpack.c.h.b16 %v130
    %v249 = vpack.c.b16 %v189, %v185
    %v250 = vpack.c.b16 %v190, %v186
    %v251 = vpack.c.b16 %v191, %v187
    %v252 = vpack.c.b16 %v192, %v188
    %v253 = vpack.c.b16 %v197, %v193
    %v254 = vpack.c.b16 %v198, %v194
    %v255 = vpack.c.b16 %v199, %v195
    %v256 = vpack.c.b16 %v200, %v196
    %v257 = vpack.c.b16 %v205, %v201
    %v258 = vpack.c.b16 %v206, %v202
    %v259 = vpack.c.b16 %v207, %v203
    %v260 = vpack.c.b16 %v208, %v204
    %v261 = vpack.c.b16 %v213, %v209
    %v262 = vpack.c.b16 %v214, %v210
    %v263 = vpack.c.b16 %v215, %v211
    %v264 = vpack.c.b16 %v216, %v212
    %v265 = vpack.c.b16 %v221, %v217
    %v266 = vpack.c.b16 %v222, %v218
    %v267 = vpack.c.b16 %v223, %v219
    %v268 = vpack.c.b16 %v224, %v220
    %v269 = vpack.c.b16 %v229, %v225
    %v270 = vpack.c.b16 %v230, %v226
    %v271 = vpack.c.b16 %v231, %v227
    %v272 = vpack.c.b16 %v232, %v228
    %v273 = vpack.c.b16 %v237, %v233
    %v274 = vpack.c.b16 %v238, %v234
    %v275 = vpack.c.b16 %v239, %v235
    %v276 = vpack.c.b16 %v240, %v236
    %v277 = vpack.c.b16 %v245, %v241
    %v278 = vpack.c.b16 %v246, %v242
    %v279 = vpack.c.b16 %v247, %v243
    %v280 = vpack.c.b16 %v248, %v244
    %313 = vmatprep.subr.bf16.mxu0 %v278
    %314 = vmatpush1.bf16.msra.mxu0 %v277
    %315 = vmatprep.subr.bf16.mxu0 %v274
    %316 = vmatpush1.bf16.msra.mxu0 %v273
    %317 = vmatprep.subr.bf16.mxu0 %v270
    %318 = vmatpush1.bf16.msra.mxu0 %v269
    %319 = vmatprep.subr.bf16.mxu0 %v266
    %320 = vmatpush1.bf16.msra.mxu0 %v265
    %321 = vmatprep.subr.bf16.mxu0 %v262
    %322 = vmatpush1.bf16.msra.mxu0 %v261
    %323 = vmatprep.subr.bf16.mxu0 %v258
    %324 = vmatpush1.bf16.msra.mxu0 %v257
    %325 = vmatprep.subr.bf16.mxu0 %v254
    %326 = vmatpush1.bf16.msra.mxu0 %v253
    %327 = vmatprep.subr.bf16.mxu0 %v250
    %328 = vmatpush1.bf16.msra.mxu0 %v249
    %329 = vmatprep.subr.bf16.mxu0 0
    %330 = vmatpush2.bf16.msra.mxu0 0
    %331 = vmatprep.subr.bf16.mxu0 0
    %332 = vmatpush2.bf16.msra.mxu0 0
    %333 = vmatprep.subr.bf16.mxu0 0
    %334 = vmatpush2.bf16.msra.mxu0 0
    %335 = vmatprep.subr.bf16.mxu0 0
    %336 = vmatpush2.bf16.msra.mxu0 0
    %337 = vmatprep.subr.bf16.mxu0 0
    %338 = vmatpush2.bf16.msra.mxu0 0
    %339 = vmatprep.subr.bf16.mxu0 0
    %340 = vmatpush2.bf16.msra.mxu0 0
    %341 = vmatprep.subr.bf16.mxu0 0
    %342 = vmatpush2.bf16.msra.mxu0 0
    %343 = vmatprep.subr.bf16.mxu0 0
    %344 = vmatpush2.bf16.msra.mxu0 0
    %345 = vmatprep.mubr.bf16.mxu0 0
    %346 = vmatmul.mubr.bf16.gmra.mxu0 %v98
    %v347 = vpop.f32.mrf.mxu0
    %v348 = vadd.f32 %v136, %v347
    %v349 = vpop.f32.mrf.mxu0
    %v350 = vadd.f32 %v140, %v349
    %v351 = vpop.f32.mrf.mxu0
    %v352 = vadd.f32 %v136, %v351
    %v353 = vpop.f32.mrf.mxu0
    %v354 = vadd.f32 %v140, %v353
    %355 = vdwg.mxu0
    %356 = vmatprep.subr.bf16.mxu0 %v280
    %357 = vmatpush1.bf16.msra.mxu0 %v279
    %358 = vmatprep.subr.bf16.mxu0 %v276
    %359 = vmatpush1.bf16.msra.mxu0 %v275
    %360 = vmatprep.subr.bf16.mxu0 %v272
    %361 = vmatpush1.bf16.msra.mxu0 %v271
    %362 = vmatprep.subr.bf16.mxu0 %v268
    %363 = vmatpush1.bf16.msra.mxu0 %v267
    %364 = vmatprep.subr.bf16.mxu0 %v264
    %365 = vmatpush1.bf16.msra.mxu0 %v263
    %366 = vmatprep.subr.bf16.mxu0 %v260
    %367 = vmatpush1.bf16.msra.mxu0 %v259
    %368 = vmatprep.subr.bf16.mxu0 %v256
    %369 = vmatpush1.bf16.msra.mxu0 %v255
    %370 = vmatprep.subr.bf16.mxu0 %v252
    %371 = vmatpush1.bf16.msra.mxu0 %v251
    %372 = vmatprep.subr.bf16.mxu0 0
    %373 = vmatpush2.bf16.msra.mxu0 0
    %374 = vmatprep.subr.bf16.mxu0 0
    %375 = vmatpush2.bf16.msra.mxu0 0
    %376 = vmatprep.subr.bf16.mxu0 0
    %377 = vmatpush2.bf16.msra.mxu0 0
    %378 = vmatprep.subr.bf16.mxu0 0
    %379 = vmatpush2.bf16.msra.mxu0 0
    %380 = vmatprep.subr.bf16.mxu0 0
    %381 = vmatpush2.bf16.msra.mxu0 0
    %382 = vmatprep.subr.bf16.mxu0 0
    %383 = vmatpush2.bf16.msra.mxu0 0
    %384 = vmatprep.subr.bf16.mxu0 0
    %385 = vmatpush2.bf16.msra.mxu0 0
    %386 = vmatprep.subr.bf16.mxu0 0
    %387 = vmatpush2.bf16.msra.mxu0 0
    %388 = vmatprep.mubr.bf16.mxu0 0
    %389 = vmatmul.mubr.bf16.gmra.mxu0 %v98
    %v390 = vpop.f32.mrf.mxu0
    %v391 = vadd.f32 %v144, %v390
    %v392 = vpop.f32.mrf.mxu0
    %v393 = vadd.f32 %v148, %v392
    %v394 = vpop.f32.mrf.mxu0
    %v395 = vadd.f32 %v144, %v394
    %v396 = vpop.f32.mrf.mxu0
    %v397 = vadd.f32 %v148, %v396
    %398 = vdwg.mxu0
    %v399 = vmax.f32 %v348, 0.0
    %v400 = vmax.f32 %v350, 0.0
    %v401 = vmax.f32 %v391, 0.0
    %v402 = vmax.f32 %v393, 0.0
    %v403 = vmax.f32 %v352, 0.0
    %v404 = vmax.f32 %v354, 0.0
    %v405 = vmax.f32 %v395, 0.0
    %v406 = vmax.f32 %v397, 0.0
    %v407 = vpack.c.bf16 %v403, %v399
    %v408 = vpack.c.bf16 %v404, %v400
    %v409 = vpack.c.bf16 %v405, %v401
    %v410 = vpack.c.bf16 %v406, %v402
    %v411 = vld [vmem:[#allocation8] sm:$0xff]
    %v412 = vld [vmem:[#allocation8 + $0x8] sm:$0xf]
    %v413 = vld [vmem:[#allocation8 + $0xc] sm:$0xff]
    %v414 = vld [vmem:[#allocation8 + $0x14] sm:$0xf]
    %v415 = vld [vmem:[#allocation8 + $0x18] sm:$0xff]
    %v416 = vld [vmem:[#allocation8 + $0x20] sm:$0xf]
    %v417 = vld [vmem:[#allocation8 + $0x24] sm:$0xff]
    %v418 = vld [vmem:[#allocation8 + $0x2c] sm:$0xf]
    %v419 = vld [vmem:[#allocation8 + $0x30] sm:$0xff]
    %v420 = vld [vmem:[#allocation8 + $0x38] sm:$0xf]
    %v421 = vld [vmem:[#allocation8 + $0x3c] sm:$0xff]
    %v422 = vld [vmem:[#allocation8 + $0x44] sm:$0xf]
    %v423 = vld [vmem:[#allocation8 + $0x48] sm:$0xff]
    %v424 = vld [vmem:[#allocation8 + $0x50] sm:$0xf]
    %v425 = vld [vmem:[#allocation8 + $0x54] sm:$0xff]
    %v426 = vld [vmem:[#allocation8 + $0x5c] sm:$0xf]
    %v427 = vld [vmem:[#allocation8 + $0x60] sm:$0xff]
    %v428 = vld [vmem:[#allocation8 + $0x68] sm:$0xf]
    %v429 = vld [vmem:[#allocation8 + $0x6c] sm:$0xff]
    %v430 = vld [vmem:[#allocation8 + $0x74] sm:$0xf]
    %v431 = vld [vmem:[#allocation8 + $0x78] sm:$0xff]
    %v432 = vld [vmem:[#allocation8 + $0x80] sm:$0xf]
    %v433 = vld [vmem:[#allocation8 + $0x84] sm:$0xff]
    %v434 = vld [vmem:[#allocation8 + $0x8c] sm:$0xf]
    %v435 = vld [vmem:[#allocation8 + $0x90] sm:$0xff]
    %v436 = vld [vmem:[#allocation8 + $0x98] sm:$0xf]
    %v437 = vld [vmem:[#allocation8 + $0x9c] sm:$0xff]
    %v438 = vld [vmem:[#allocation8 + $0xa4] sm:$0xf]
    %v439 = vld [vmem:[#allocation8 + $0xa8] sm:$0xff]
    %v440 = vld [vmem:[#allocation8 + $0xb0] sm:$0xf]
    %v441 = vld [vmem:[#allocation8 + $0xb4] sm:$0xff]
    %v442 = vld [vmem:[#allocation8 + $0xbc] sm:$0xf]
    %v443 = vld [vmem:[#allocation8 + $0xc0] sm:$0xff]
    %v444 = vld [vmem:[#allocation8 + $0xc8] sm:$0xf]
    %v445 = vld [vmem:[#allocation8 + $0xcc] sm:$0xff]
    %v446 = vld [vmem:[#allocation8 + $0xd4] sm:$0xf]
    %v447 = vld [vmem:[#allocation8 + $0xd8] sm:$0xff]
    %v448 = vld [vmem:[#allocation8 + $0xe0] sm:$0xf]
    %v449 = vld [vmem:[#allocation8 + $0xe4] sm:$0xff]
    %v450 = vld [vmem:[#allocation8 + $0xec] sm:$0xf]
    %v451 = vld [vmem:[#allocation8 + $0xf0] sm:$0xff]
    %v452 = vld [vmem:[#allocation8 + $0xf8] sm:$0xf]
    %v453 = vld [vmem:[#allocation8 + $0xfc] sm:$0xff]
    %v454 = vld [vmem:[#allocation8 + $0x104] sm:$0xf]
    %v455 = vld [vmem:[#allocation8 + $0x108] sm:$0xff]
    %v456 = vld [vmem:[#allocation8 + $0x110] sm:$0xf]
    %v457 = vld [vmem:[#allocation8 + $0x114] sm:$0xff]
    %v458 = vld [vmem:[#allocation8 + $0x11c] sm:$0xf]
    %v459 = vld [vmem:[#allocation8 + $0x120] sm:$0xff]
    %v460 = vld [vmem:[#allocation8 + $0x128] sm:$0xf]
    %v461 = vld [vmem:[#allocation8 + $0x12c] sm:$0xff]
    %v462 = vld [vmem:[#allocation8 + $0x134] sm:$0xf]
    %v463 = vld [vmem:[#allocation8 + $0x138] sm:$0xff]
    %v464 = vld [vmem:[#allocation8 + $0x140] sm:$0xf]
    %v465 = vld [vmem:[#allocation8 + $0x144] sm:$0xff]
    %v466 = vld [vmem:[#allocation8 + $0x14c] sm:$0xf]
    %v467 = vld [vmem:[#allocation8 + $0x150] sm:$0xff]
    %v468 = vld [vmem:[#allocation8 + $0x158] sm:$0xf]
    %v469 = vld [vmem:[#allocation8 + $0x15c] sm:$0xff]
    %v470 = vld [vmem:[#allocation8 + $0x164] sm:$0xf]
    %v471 = vld [vmem:[#allocation8 + $0x168] sm:$0xff]
    %v472 = vld [vmem:[#allocation8 + $0x170] sm:$0xf]
    %v473 = vld [vmem:[#allocation8 + $0x174] sm:$0xff]
    %v474 = vld [vmem:[#allocation8 + $0x17c] sm:$0xf]
    %v475 = vld [vmem:[#allocation8 + $0x180] sm:$0xff]
    %v476 = vld [vmem:[#allocation8 + $0x188] sm:$0xf]
    %v477 = vld [vmem:[#allocation8 + $0x18c] sm:$0xff]
    %v478 = vld [vmem:[#allocation8 + $0x194] sm:$0xf]
    %v479 = vld [vmem:[#allocation8 + $0x198] sm:$0xff]
    %v480 = vld [vmem:[#allocation8 + $0x1a0] sm:$0xf]
    %v481 = vld [vmem:[#allocation8 + $0x1a4] sm:$0xff]
    %v482 = vld [vmem:[#allocation8 + $0x1ac] sm:$0xf]
    %v483 = vld [vmem:[#allocation8 + $0x1b0] sm:$0xff]
    %v484 = vld [vmem:[#allocation8 + $0x1b8] sm:$0xf]
    %v485 = vld [vmem:[#allocation8 + $0x1bc] sm:$0xff]
    %v486 = vld [vmem:[#allocation8 + $0x1c4] sm:$0xf]
    %v487 = vld [vmem:[#allocation8 + $0x1c8] sm:$0xff]
    %v488 = vld [vmem:[#allocation8 + $0x1d0] sm:$0xf]
    %v489 = vld [vmem:[#allocation8 + $0x1d4] sm:$0xff]
    %v490 = vld [vmem:[#allocation8 + $0x1dc] sm:$0xf]
    %v491 = vld [vmem:[#allocation8 + $0x1e0] sm:$0xff]
    %v492 = vld [vmem:[#allocation8 + $0x1e8] sm:$0xf]
    %v493 = vld [vmem:[#allocation8 + $0x1ec] sm:$0xff]
    %v494 = vld [vmem:[#allocation8 + $0x1f4] sm:$0xf]
    %v495 = vld [vmem:[#allocation8 + $0x1f8] sm:$0xff]
    %v496 = vld [vmem:[#allocation8 + $0x200] sm:$0xf]
    %v497 = vld [vmem:[#allocation8 + $0x204] sm:$0xff]
    %v498 = vld [vmem:[#allocation8 + $0x20c] sm:$0xf]
    %v499 = vld [vmem:[#allocation8 + $0x210] sm:$0xff]
    %v500 = vld [vmem:[#allocation8 + $0x218] sm:$0xf]
    %v501 = vld [vmem:[#allocation8 + $0x21c] sm:$0xff]
    %v502 = vld [vmem:[#allocation8 + $0x224] sm:$0xf]
    %v503 = vld [vmem:[#allocation8 + $0x228] sm:$0xff]
    %v504 = vld [vmem:[#allocation8 + $0x230] sm:$0xf]
    %v505 = vld [vmem:[#allocation8 + $0x234] sm:$0xff]
    %v506 = vld [vmem:[#allocation8 + $0x23c] sm:$0xf]
    %v507 = vld [vmem:[#allocation8 + $0x240] sm:$0xff]
    %v508 = vld [vmem:[#allocation8 + $0x248] sm:$0xf]
    %v509 = vld [vmem:[#allocation8 + $0x24c] sm:$0xff]
    %v510 = vld [vmem:[#allocation8 + $0x254] sm:$0xf]
    %v511 = vld [vmem:[#allocation8 + $0x258] sm:$0xff]
    %v512 = vld [vmem:[#allocation8 + $0x260] sm:$0xf]
    %v513 = vld [vmem:[#allocation8 + $0x264] sm:$0xff]
    %v514 = vld [vmem:[#allocation8 + $0x26c] sm:$0xf]
    %v515 = vld [vmem:[#allocation8 + $0x270] sm:$0xff]
    %v516 = vld [vmem:[#allocation8 + $0x278] sm:$0xf]
    %v517 = vld [vmem:[#allocation8 + $0x27c] sm:$0xff]
    %v518 = vld [vmem:[#allocation8 + $0x284] sm:$0xf]
    %v519 = vld [vmem:[#allocation8 + $0x288] sm:$0xff]
    %v520 = vld [vmem:[#allocation8 + $0x290] sm:$0xf]
    %v521 = vld [vmem:[#allocation8 + $0x294] sm:$0xff]
    %v522 = vld [vmem:[#allocation8 + $0x29c] sm:$0xf]
    %v523 = vld [vmem:[#allocation8 + $0x2a0] sm:$0xff]
    %v524 = vld [vmem:[#allocation8 + $0x2a8] sm:$0xf]
    %v525 = vld [vmem:[#allocation8 + $0x2ac] sm:$0xff]
    %v526 = vld [vmem:[#allocation8 + $0x2b4] sm:$0xf]
    %v527 = vld [vmem:[#allocation8 + $0x2b8] sm:$0xff]
    %v528 = vld [vmem:[#allocation8 + $0x2c0] sm:$0xf]
    %v529 = vld [vmem:[#allocation8 + $0x2c4] sm:$0xff]
    %v530 = vld [vmem:[#allocation8 + $0x2cc] sm:$0xf]
    %v531 = vld [vmem:[#allocation8 + $0x2d0] sm:$0xff]
    %v532 = vld [vmem:[#allocation8 + $0x2d8] sm:$0xf]
    %v533 = vld [vmem:[#allocation8 + $0x2dc] sm:$0xff]
    %v534 = vld [vmem:[#allocation8 + $0x2e4] sm:$0xf]
    %v535 = vld [vmem:[#allocation8 + $0x2e8] sm:$0xff]
    %v536 = vld [vmem:[#allocation8 + $0x2f0] sm:$0xf]
    %v537 = vld [vmem:[#allocation8 + $0x2f4] sm:$0xff]
    %v538 = vld [vmem:[#allocation8 + $0x2fc] sm:$0xf]
    %v539 = vld [vmem:[%s4] sm:$0x7]
    %v541 = vlaneseq
    %v542 = vshrl.u32 %v541, 7
    %v543 = vsub.s32 0, %v542
    %v544 = vrot.slane %v539, %v543
    %v545 = vlaneseq
    %v546 = vshrl.u32 %v545, 7
    %v547 = vsub.s32 1, %v546
    %v548 = vrot.slane %v539, %v547
    %v549 = vlaneseq
    %v550 = vshrl.u32 %v549, 7
    %v551 = vsub.s32 2, %v550
    %v552 = vrot.slane %v539, %v551
    %v684 = vunpack.c.l.b16 %v411
    %v685 = vunpack.c.h.b16 %v411
    %v686 = vunpack.c.l.b16 %v412
    %v687 = vunpack.c.l.b16 %v413
    %v688 = vunpack.c.h.b16 %v413
    %v689 = vunpack.c.l.b16 %v414
    %v690 = vunpack.c.l.b16 %v415
    %v691 = vunpack.c.h.b16 %v415
    %v692 = vunpack.c.l.b16 %v416
    %v693 = vunpack.c.l.b16 %v417
    %v694 = vunpack.c.h.b16 %v417
    %v695 = vunpack.c.l.b16 %v418
    %v696 = vunpack.c.l.b16 %v419
    %v697 = vunpack.c.h.b16 %v419
    %v698 = vunpack.c.l.b16 %v420
    %v699 = vunpack.c.l.b16 %v421
    %v700 = vunpack.c.h.b16 %v421
    %v701 = vunpack.c.l.b16 %v422
    %v702 = vunpack.c.l.b16 %v423
    %v703 = vunpack.c.h.b16 %v423
    %v704 = vunpack.c.l.b16 %v424
    %v705 = vunpack.c.l.b16 %v425
    %v706 = vunpack.c.h.b16 %v425
    %v707 = vunpack.c.l.b16 %v426
    %v708 = vunpack.c.l.b16 %v427
    %v709 = vunpack.c.h.b16 %v427
    %v710 = vunpack.c.l.b16 %v428
    %v711 = vunpack.c.l.b16 %v429
    %v712 = vunpack.c.h.b16 %v429
    %v713 = vunpack.c.l.b16 %v430
    %v714 = vunpack.c.l.b16 %v431
    %v715 = vunpack.c.h.b16 %v431
    %v716 = vunpack.c.l.b16 %v432
    %v717 = vunpack.c.l.b16 %v433
    %v718 = vunpack.c.h.b16 %v433
    %v719 = vunpack.c.l.b16 %v434
    %v720 = vunpack.c.l.b16 %v435
    %v721 = vunpack.c.h.b16 %v435
    %v722 = vunpack.c.l.b16 %v436
    %v723 = vunpack.c.l.b16 %v437
    %v724 = vunpack.c.h.b16 %v437
    %v725 = vunpack.c.l.b16 %v438
    %v726 = vunpack.c.l.b16 %v439
    %v727 = vunpack.c.h.b16 %v439
    %v728 = vunpack.c.l.b16 %v440
    %v729 = vunpack.c.l.b16 %v441
    %v730 = vunpack.c.h.b16 %v441
    %v731 = vunpack.c.l.b16 %v442
    %v732 = vunpack.c.l.b16 %v443
    %v733 = vunpack.c.h.b16 %v443
    %v734 = vunpack.c.l.b16 %v444
    %v735 = vunpack.c.l.b16 %v445
    %v736 = vunpack.c.h.b16 %v445
    %v737 = vunpack.c.l.b16 %v446
    %v738 = vunpack.c.l.b16 %v447
    %v739 = vunpack.c.h.b16 %v447
    %v740 = vunpack.c.l.b16 %v448
    %v741 = vunpack.c.l.b16 %v449
    %v742 = vunpack.c.h.b16 %v449
    %v743 = vunpack.c.l.b16 %v450
    %v744 = vunpack.c.l.b16 %v451
    %v745 = vunpack.c.h.b16 %v451
    %v746 = vunpack.c.l.b16 %v452
    %v747 = vunpack.c.l.b16 %v453
    %v748 = vunpack.c.h.b16 %v453
    %v749 = vunpack.c.l.b16 %v454
    %v750 = vunpack.c.l.b16 %v455
    %v751 = vunpack.c.h.b16 %v455
    %v752 = vunpack.c.l.b16 %v456
    %v753 = vunpack.c.l.b16 %v457
    %v754 = vunpack.c.h.b16 %v457
    %v755 = vunpack.c.l.b16 %v458
    %v756 = vunpack.c.l.b16 %v459
    %v757 = vunpack.c.h.b16 %v459
    %v758 = vunpack.c.l.b16 %v460
    %v759 = vunpack.c.l.b16 %v461
    %v760 = vunpack.c.h.b16 %v461
    %v761 = vunpack.c.l.b16 %v462
    %v762 = vunpack.c.l.b16 %v463
    %v763 = vunpack.c.h.b16 %v463
    %v764 = vunpack.c.l.b16 %v464
    %v765 = vunpack.c.l.b16 %v465
    %v766 = vunpack.c.h.b16 %v465
    %v767 = vunpack.c.l.b16 %v466
    %v768 = vunpack.c.l.b16 %v467
    %v769 = vunpack.c.h.b16 %v467
    %v770 = vunpack.c.l.b16 %v468
    %v771 = vunpack.c.l.b16 %v469
    %v772 = vunpack.c.h.b16 %v469
    %v773 = vunpack.c.l.b16 %v470
    %v774 = vunpack.c.l.b16 %v471
    %v775 = vunpack.c.h.b16 %v471
    %v776 = vunpack.c.l.b16 %v472
    %v777 = vunpack.c.l.b16 %v473
    %v778 = vunpack.c.h.b16 %v473
    %v779 = vunpack.c.l.b16 %v474
    %v780 = vunpack.c.l.b16 %v475
    %v781 = vunpack.c.h.b16 %v475
    %v782 = vunpack.c.l.b16 %v476
    %v783 = vunpack.c.l.b16 %v477
    %v784 = vunpack.c.h.b16 %v477
    %v785 = vunpack.c.l.b16 %v478
    %v786 = vunpack.c.l.b16 %v479
    %v787 = vunpack.c.h.b16 %v479
    %v788 = vunpack.c.l.b16 %v480
    %v789 = vunpack.c.l.b16 %v481
    %v790 = vunpack.c.h.b16 %v481
    %v791 = vunpack.c.l.b16 %v482
    %v792 = vunpack.c.l.b16 %v483
    %v793 = vunpack.c.h.b16 %v483
    %v794 = vunpack.c.l.b16 %v484
    %v795 = vunpack.c.l.b16 %v485
    %v796 = vunpack.c.h.b16 %v485
    %v797 = vunpack.c.l.b16 %v486
    %v798 = vunpack.c.l.b16 %v487
    %v799 = vunpack.c.h.b16 %v487
    %v800 = vunpack.c.l.b16 %v488
    %v801 = vunpack.c.l.b16 %v489
    %v802 = vunpack.c.h.b16 %v489
    %v803 = vunpack.c.l.b16 %v490
    %v804 = vunpack.c.l.b16 %v491
    %v805 = vunpack.c.h.b16 %v491
    %v806 = vunpack.c.l.b16 %v492
    %v807 = vunpack.c.l.b16 %v493
    %v808 = vunpack.c.h.b16 %v493
    %v809 = vunpack.c.l.b16 %v494
    %v810 = vunpack.c.l.b16 %v495
    %v811 = vunpack.c.h.b16 %v495
    %v812 = vunpack.c.l.b16 %v496
    %v813 = vunpack.c.l.b16 %v497
    %v814 = vunpack.c.h.b16 %v497
    %v815 = vunpack.c.l.b16 %v498
    %v816 = vunpack.c.l.b16 %v499
    %v817 = vunpack.c.h.b16 %v499
    %v818 = vunpack.c.l.b16 %v500
    %v819 = vunpack.c.l.b16 %v501
    %v820 = vunpack.c.h.b16 %v501
    %v821 = vunpack.c.l.b16 %v502
    %v822 = vunpack.c.l.b16 %v503
    %v823 = vunpack.c.h.b16 %v503
    %v824 = vunpack.c.l.b16 %v504
    %v825 = vunpack.c.l.b16 %v505
    %v826 = vunpack.c.h.b16 %v505
    %v827 = vunpack.c.l.b16 %v506
    %v828 = vunpack.c.l.b16 %v507
    %v829 = vunpack.c.h.b16 %v507
    %v830 = vunpack.c.l.b16 %v508
    %v831 = vunpack.c.l.b16 %v509
    %v832 = vunpack.c.h.b16 %v509
    %v833 = vunpack.c.l.b16 %v510
    %v834 = vunpack.c.l.b16 %v511
    %v835 = vunpack.c.h.b16 %v511
    %v836 = vunpack.c.l.b16 %v512
    %v837 = vunpack.c.l.b16 %v513
    %v838 = vunpack.c.h.b16 %v513
    %v839 = vunpack.c.l.b16 %v514
    %v840 = vunpack.c.l.b16 %v515
    %v841 = vunpack.c.h.b16 %v515
    %v842 = vunpack.c.l.b16 %v516
    %v843 = vunpack.c.l.b16 %v517
    %v844 = vunpack.c.h.b16 %v517
    %v845 = vunpack.c.l.b16 %v518
    %v846 = vunpack.c.l.b16 %v519
    %v847 = vunpack.c.h.b16 %v519
    %v848 = vunpack.c.l.b16 %v520
    %v849 = vunpack.c.l.b16 %v521
    %v850 = vunpack.c.h.b16 %v521
    %v851 = vunpack.c.l.b16 %v522
    %v852 = vunpack.c.l.b16 %v523
    %v853 = vunpack.c.h.b16 %v523
    %v854 = vunpack.c.l.b16 %v524
    %v855 = vunpack.c.l.b16 %v525
    %v856 = vunpack.c.h.b16 %v525
    %v857 = vunpack.c.l.b16 %v526
    %v858 = vunpack.c.l.b16 %v527
    %v859 = vunpack.c.h.b16 %v527
    %v860 = vunpack.c.l.b16 %v528
    %v861 = vunpack.c.l.b16 %v529
    %v862 = vunpack.c.h.b16 %v529
    %v863 = vunpack.c.l.b16 %v530
    %v864 = vunpack.c.l.b16 %v531
    %v865 = vunpack.c.h.b16 %v531
    %v866 = vunpack.c.l.b16 %v532
    %v867 = vunpack.c.l.b16 %v533
    %v868 = vunpack.c.h.b16 %v533
    %v869 = vunpack.c.l.b16 %v534
    %v870 = vunpack.c.l.b16 %v535
    %v871 = vunpack.c.h.b16 %v535
    %v872 = vunpack.c.l.b16 %v536
    %v873 = vunpack.c.l.b16 %v537
    %v874 = vunpack.c.h.b16 %v537
    %v875 = vunpack.c.l.b16 %v538
    %v876 = vpack.c.b16 %v687, %v684
    %v877 = vpack.c.b16 %v688, %v685
    %v878 = vpack.c.b16 %v689, %v686
    %v879 = vpack.c.b16 %v693, %v690
    %v880 = vpack.c.b16 %v694, %v691
    %v881 = vpack.c.b16 %v695, %v692
    %v882 = vpack.c.b16 %v699, %v696
    %v883 = vpack.c.b16 %v700, %v697
    %v884 = vpack.c.b16 %v701, %v698
    %v885 = vpack.c.b16 %v705, %v702
    %v886 = vpack.c.b16 %v706, %v703
    %v887 = vpack.c.b16 %v707, %v704
    %v888 = vpack.c.b16 %v711, %v708
    %v889 = vpack.c.b16 %v712, %v709
    %v890 = vpack.c.b16 %v713, %v710
    %v891 = vpack.c.b16 %v717, %v714
    %v892 = vpack.c.b16 %v718, %v715
    %v893 = vpack.c.b16 %v719, %v716
    %v894 = vpack.c.b16 %v723, %v720
    %v895 = vpack.c.b16 %v724, %v721
    %v896 = vpack.c.b16 %v725, %v722
    %v897 = vpack.c.b16 %v729, %v726
    %v898 = vpack.c.b16 %v730, %v727
    %v899 = vpack.c.b16 %v731, %v728
    %v900 = vpack.c.b16 %v735, %v732
    %v901 = vpack.c.b16 %v736, %v733
    %v902 = vpack.c.b16 %v737, %v734
    %v903 = vpack.c.b16 %v741, %v738
    %v904 = vpack.c.b16 %v742, %v739
    %v905 = vpack.c.b16 %v743, %v740
    %v906 = vpack.c.b16 %v747, %v744
    %v907 = vpack.c.b16 %v748, %v745
    %v908 = vpack.c.b16 %v749, %v746
    %v909 = vpack.c.b16 %v753, %v750
    %v910 = vpack.c.b16 %v754, %v751
    %v911 = vpack.c.b16 %v755, %v752
    %v912 = vpack.c.b16 %v759, %v756
    %v913 = vpack.c.b16 %v760, %v757
    %v914 = vpack.c.b16 %v761, %v758
    %v915 = vpack.c.b16 %v765, %v762
    %v916 = vpack.c.b16 %v766, %v763
    %v917 = vpack.c.b16 %v767, %v764
    %v918 = vpack.c.b16 %v771, %v768
    %v919 = vpack.c.b16 %v772, %v769
    %v920 = vpack.c.b16 %v773, %v770
    %v921 = vpack.c.b16 %v777, %v774
    %v922 = vpack.c.b16 %v778, %v775
    %v923 = vpack.c.b16 %v779, %v776
    %v924 = vpack.c.b16 %v783, %v780
    %v925 = vpack.c.b16 %v784, %v781
    %v926 = vpack.c.b16 %v785, %v782
    %v927 = vpack.c.b16 %v789, %v786
    %v928 = vpack.c.b16 %v790, %v787
    %v929 = vpack.c.b16 %v791, %v788
    %v930 = vpack.c.b16 %v795, %v792
    %v931 = vpack.c.b16 %v796, %v793
    %v932 = vpack.c.b16 %v797, %v794
    %v933 = vpack.c.b16 %v801, %v798
    %v934 = vpack.c.b16 %v802, %v799
    %v935 = vpack.c.b16 %v803, %v800
    %v936 = vpack.c.b16 %v807, %v804
    %v937 = vpack.c.b16 %v808, %v805
    %v938 = vpack.c.b16 %v809, %v806
    %v939 = vpack.c.b16 %v813, %v810
    %v940 = vpack.c.b16 %v814, %v811
    %v941 = vpack.c.b16 %v815, %v812
    %v942 = vpack.c.b16 %v819, %v816
    %v943 = vpack.c.b16 %v820, %v817
    %v944 = vpack.c.b16 %v821, %v818
    %v945 = vpack.c.b16 %v825, %v822
    %v946 = vpack.c.b16 %v826, %v823
    %v947 = vpack.c.b16 %v827, %v824
    %v948 = vpack.c.b16 %v831, %v828
    %v949 = vpack.c.b16 %v832, %v829
    %v950 = vpack.c.b16 %v833, %v830
    %v951 = vpack.c.b16 %v837, %v834
    %v952 = vpack.c.b16 %v838, %v835
    %v953 = vpack.c.b16 %v839, %v836
    %v954 = vpack.c.b16 %v843, %v840
    %v955 = vpack.c.b16 %v844, %v841
    %v956 = vpack.c.b16 %v845, %v842
    %v957 = vpack.c.b16 %v849, %v846
    %v958 = vpack.c.b16 %v850, %v847
    %v959 = vpack.c.b16 %v851, %v848
    %v960 = vpack.c.b16 %v855, %v852
    %v961 = vpack.c.b16 %v856, %v853
    %v962 = vpack.c.b16 %v857, %v854
    %v963 = vpack.c.b16 %v861, %v858
    %v964 = vpack.c.b16 %v862, %v859
    %v965 = vpack.c.b16 %v863, %v860
    %v966 = vpack.c.b16 %v867, %v864
    %v967 = vpack.c.b16 %v868, %v865
    %v968 = vpack.c.b16 %v869, %v866
    %v969 = vpack.c.b16 %v873, %v870
    %v970 = vpack.c.b16 %v874, %v871
    %v971 = vpack.c.b16 %v875, %v872
    %1068 = vmatprep.subr.bf16.mxu0 %v898
    %1069 = vmatpush1.bf16.msra.mxu0 %v897
    %1070 = vmatprep.subr.bf16.mxu0 %v895
    %1071 = vmatpush1.bf16.msra.mxu0 %v894
    %1072 = vmatprep.subr.bf16.mxu0 %v892
    %1073 = vmatpush1.bf16.msra.mxu0 %v891
    %1074 = vmatprep.subr.bf16.mxu0 %v889
    %1075 = vmatpush1.bf16.msra.mxu0 %v888
    %1076 = vmatprep.subr.bf16.mxu0 %v886
    %1077 = vmatpush1.bf16.msra.mxu0 %v885
    %1078 = vmatprep.subr.bf16.mxu0 %v883
    %1079 = vmatpush1.bf16.msra.mxu0 %v882
    %1080 = vmatprep.subr.bf16.mxu0 %v880
    %1081 = vmatpush1.bf16.msra.mxu0 %v879
    %1082 = vmatprep.subr.bf16.mxu0 %v877
    %1083 = vmatpush1.bf16.msra.mxu0 %v876
    %1084 = vmatprep.subr.bf16.mxu0 %v922
    %1085 = vmatpush2.bf16.msra.mxu0 %v921
    %1086 = vmatprep.subr.bf16.mxu0 %v919
    %1087 = vmatpush2.bf16.msra.mxu0 %v918
    %1088 = vmatprep.subr.bf16.mxu0 %v916
    %1089 = vmatpush2.bf16.msra.mxu0 %v915
    %1090 = vmatprep.subr.bf16.mxu0 %v913
    %1091 = vmatpush2.bf16.msra.mxu0 %v912
    %1092 = vmatprep.subr.bf16.mxu0 %v910
    %1093 = vmatpush2.bf16.msra.mxu0 %v909
    %1094 = vmatprep.subr.bf16.mxu0 %v907
    %1095 = vmatpush2.bf16.msra.mxu0 %v906
    %1096 = vmatprep.subr.bf16.mxu0 %v904
    %1097 = vmatpush2.bf16.msra.mxu0 %v903
    %1098 = vmatprep.subr.bf16.mxu0 %v901
    %1099 = vmatpush2.bf16.msra.mxu0 %v900
    %1100 = vmatprep.mubr.bf16.mxu0 %v408
    %1101 = vmatmul.mubr.bf16.gmra.mxu0 %v407
    %v1102 = vpop.f32.mrf.mxu0
    %v1103 = vadd.f32 %v544, %v1102
    %v1104 = vpop.f32.mrf.mxu0
    %v1105 = vadd.f32 %v548, %v1104
    %v1106 = vpop.f32.mrf.mxu0
    %v1107 = vadd.f32 %v544, %v1106
    %v1108 = vpop.f32.mrf.mxu0
    %v1109 = vadd.f32 %v548, %v1108
    %1110 = vdwg.mxu0
    %1111 = vmatprep.subr.bf16.mxu0 %v946
    %1112 = vmatpush1.bf16.msra.mxu0 %v945
    %1113 = vmatprep.subr.bf16.mxu0 %v943
    %1114 = vmatpush1.bf16.msra.mxu0 %v942
    %1115 = vmatprep.subr.bf16.mxu0 %v940
    %1116 = vmatpush1.bf16.msra.mxu0 %v939
    %1117 = vmatprep.subr.bf16.mxu0 %v937
    %1118 = vmatpush1.bf16.msra.mxu0 %v936
    %1119 = vmatprep.subr.bf16.mxu0 %v934
    %1120 = vmatpush1.bf16.msra.mxu0 %v933
    %1121 = vmatprep.subr.bf16.mxu0 %v931
    %1122 = vmatpush1.bf16.msra.mxu0 %v930
    %1123 = vmatprep.subr.bf16.mxu0 %v928
    %1124 = vmatpush1.bf16.msra.mxu0 %v927
    %1125 = vmatprep.subr.bf16.mxu0 %v925
    %1126 = vmatpush1.bf16.msra.mxu0 %v924
    %1127 = vmatprep.subr.bf16.mxu0 %v970
    %1128 = vmatpush2.bf16.msra.mxu0 %v969
    %1129 = vmatprep.subr.bf16.mxu0 %v967
    %1130 = vmatpush2.bf16.msra.mxu0 %v966
    %1131 = vmatprep.subr.bf16.mxu0 %v964
    %1132 = vmatpush2.bf16.msra.mxu0 %v963
    %1133 = vmatprep.subr.bf16.mxu0 %v961
    %1134 = vmatpush2.bf16.msra.mxu0 %v960
    %1135 = vmatprep.subr.bf16.mxu0 %v958
    %1136 = vmatpush2.bf16.msra.mxu0 %v957
    %1137 = vmatprep.subr.bf16.mxu0 %v955
    %1138 = vmatpush2.bf16.msra.mxu0 %v954
    %1139 = vmatprep.subr.bf16.mxu0 %v952
    %1140 = vmatpush2.bf16.msra.mxu0 %v951
    %1141 = vmatprep.subr.bf16.mxu0 %v949
    %1142 = vmatpush2.bf16.msra.mxu0 %v948
    %1143 = vmatprep.mubr.bf16.mxu0 %v410
    %1144 = vmatmul.mubr.bf16.gmra.mxu0 %v409
    %v1145 = vpop.f32.mrf.mxu0
    %v1146 = vadd.f32 %v1103, %v1145
    %v1147 = vpop.f32.mrf.mxu0
    %v1148 = vadd.f32 %v1105, %v1147
    %v1149 = vpop.f32.mrf.mxu0
    %v1150 = vadd.f32 %v1107, %v1149
    %v1151 = vpop.f32.mrf.mxu0
    %v1152 = vadd.f32 %v1109, %v1151
    %1153 = vdwg.mxu0
    %1154 = vmatprep.subr.bf16.mxu0 0
    %1155 = vmatpush1.bf16.msra.mxu0 %v899
    %1156 = vmatprep.subr.bf16.mxu0 0
    %1157 = vmatpush1.bf16.msra.mxu0 %v896
    %1158 = vmatprep.subr.bf16.mxu0 0
    %1159 = vmatpush1.bf16.msra.mxu0 %v893
    %1160 = vmatprep.subr.bf16.mxu0 0
    %1161 = vmatpush1.bf16.msra.mxu0 %v890
    %1162 = vmatprep.subr.bf16.mxu0 0
    %1163 = vmatpush1.bf16.msra.mxu0 %v887
    %1164 = vmatprep.subr.bf16.mxu0 0
    %1165 = vmatpush1.bf16.msra.mxu0 %v884
    %1166 = vmatprep.subr.bf16.mxu0 0
    %1167 = vmatpush1.bf16.msra.mxu0 %v881
    %1168 = vmatprep.subr.bf16.mxu0 0
    %1169 = vmatpush1.bf16.msra.mxu0 %v878
    %1170 = vmatprep.subr.bf16.mxu0 0
    %1171 = vmatpush2.bf16.msra.mxu0 %v923
    %1172 = vmatprep.subr.bf16.mxu0 0
    %1173 = vmatpush2.bf16.msra.mxu0 %v920
    %1174 = vmatprep.subr.bf16.mxu0 0
    %1175 = vmatpush2.bf16.msra.mxu0 %v917
    %1176 = vmatprep.subr.bf16.mxu0 0
    %1177 = vmatpush2.bf16.msra.mxu0 %v914
    %1178 = vmatprep.subr.bf16.mxu0 0
    %1179 = vmatpush2.bf16.msra.mxu0 %v911
    %1180 = vmatprep.subr.bf16.mxu0 0
    %1181 = vmatpush2.bf16.msra.mxu0 %v908
    %1182 = vmatprep.subr.bf16.mxu0 0
    %1183 = vmatpush2.bf16.msra.mxu0 %v905
    %1184 = vmatprep.subr.bf16.mxu0 0
    %1185 = vmatpush2.bf16.msra.mxu0 %v902
    %1186 = vmatprep.mubr.bf16.mxu0 %v408
    %1187 = vmatmul.mubr.bf16.gmra.mxu0 %v407
    %v1188 = vpop.f32.mrf.mxu0
    %v1189 = vadd.f32 %v552, %v1188
    %v1190 = vpop.f32.mrf.mxu0
    %v1191 = vpop.f32.mrf.mxu0
    %v1192 = vadd.f32 %v552, %v1191
    %v1193 = vpop.f32.mrf.mxu0
    %1194 = vdwg.mxu0
    %1195 = vmatprep.subr.bf16.mxu0 0
    %1196 = vmatpush1.bf16.msra.mxu0 %v947
    %1197 = vmatprep.subr.bf16.mxu0 0
    %1198 = vmatpush1.bf16.msra.mxu0 %v944
    %1199 = vmatprep.subr.bf16.mxu0 0
    %1200 = vmatpush1.bf16.msra.mxu0 %v941
    %1201 = vmatprep.subr.bf16.mxu0 0
    %1202 = vmatpush1.bf16.msra.mxu0 %v938
    %1203 = vmatprep.subr.bf16.mxu0 0
    %1204 = vmatpush1.bf16.msra.mxu0 %v935
    %1205 = vmatprep.subr.bf16.mxu0 0
    %1206 = vmatpush1.bf16.msra.mxu0 %v932
    %1207 = vmatprep.subr.bf16.mxu0 0
    %1208 = vmatpush1.bf16.msra.mxu0 %v929
    %1209 = vmatprep.subr.bf16.mxu0 0
    %1210 = vmatpush1.bf16.msra.mxu0 %v926
    %1211 = vmatprep.subr.bf16.mxu0 0
    %1212 = vmatpush2.bf16.msra.mxu0 %v971
    %1213 = vmatprep.subr.bf16.mxu0 0
    %1214 = vmatpush2.bf16.msra.mxu0 %v968
    %1215 = vmatprep.subr.bf16.mxu0 0
    %1216 = vmatpush2.bf16.msra.mxu0 %v965
    %1217 = vmatprep.subr.bf16.mxu0 0
    %1218 = vmatpush2.bf16.msra.mxu0 %v962
    %1219 = vmatprep.subr.bf16.mxu0 0
    %1220 = vmatpush2.bf16.msra.mxu0 %v959
    %1221 = vmatprep.subr.bf16.mxu0 0
    %1222 = vmatpush2.bf16.msra.mxu0 %v956
    %1223 = vmatprep.subr.bf16.mxu0 0
    %1224 = vmatpush2.bf16.msra.mxu0 %v953
    %1225 = vmatprep.subr.bf16.mxu0 0
    %1226 = vmatpush2.bf16.msra.mxu0 %v950
    %1227 = vmatprep.mubr.bf16.mxu0 %v410
    %1228 = vmatmul.mubr.bf16.gmra.mxu0 %v409
    %v1229 = vpop.f32.mrf.mxu0
    %v1230 = vadd.f32 %v1189, %v1229
    %v1231 = vpop.f32.mrf.mxu0
    %v1232 = vpop.f32.mrf.mxu0
    %v1233 = vadd.f32 %v1192, %v1232
    %v1234 = vpop.f32.mrf.mxu0
    %1235 = vdwg.mxu0
    %v1236 = vmax.f32 %v1146, 0.0
    %v1237 = vmax.f32 %v1148, 0.0
    %v1238 = vmax.f32 %v1230, 0.0
    %v1239 = vmax.f32 %v1150, 0.0
    %v1240 = vmax.f32 %v1152, 0.0
    %v1241 = vmax.f32 %v1233, 0.0
    %v1242 = vpack.c.bf16 %v1239, %v1236
    %v1243 = vpack.c.bf16 %v1240, %v1237
    %v1244 = vpack.c.bf16 %v1241, %v1238
    %v1245 = vld [vmem:[#allocation10] sm:$0xf]
    %v1246 = vld [vmem:[#allocation10 + $0x4] sm:$0xf]
    %v1247 = vld [vmem:[#allocation10 + $0x8] sm:$0xf]
    %v1248 = vld [vmem:[#allocation10 + $0xc] sm:$0xf]
    %v1249 = vld [vmem:[#allocation10 + $0x10] sm:$0xf]
    %v1250 = vld [vmem:[#allocation10 + $0x14] sm:$0xf]
    %v1251 = vld [vmem:[#allocation10 + $0x18] sm:$0xf]
    %v1252 = vld [vmem:[#allocation10 + $0x1c] sm:$0xf]
    %v1253 = vld [vmem:[#allocation10 + $0x20] sm:$0xf]
    %v1254 = vld [vmem:[#allocation10 + $0x24] sm:$0xf]
    %v1255 = vld [vmem:[#allocation10 + $0x28] sm:$0xf]
    %v1256 = vld [vmem:[#allocation10 + $0x2c] sm:$0xf]
    %v1257 = vld [vmem:[#allocation10 + $0x30] sm:$0xf]
    %v1258 = vld [vmem:[#allocation10 + $0x34] sm:$0xf]
    %v1259 = vld [vmem:[#allocation10 + $0x38] sm:$0xf]
    %v1260 = vld [vmem:[#allocation10 + $0x3c] sm:$0xf]
    %v1261 = vld [vmem:[#allocation10 + $0x40] sm:$0xf]
    %v1262 = vld [vmem:[#allocation10 + $0x44] sm:$0xf]
    %v1263 = vld [vmem:[#allocation10 + $0x48] sm:$0xf]
    %v1264 = vld [vmem:[#allocation10 + $0x4c] sm:$0xf]
    %v1265 = vld [vmem:[#allocation10 + $0x50] sm:$0xf]
    %v1266 = vld [vmem:[#allocation10 + $0x54] sm:$0xf]
    %v1267 = vld [vmem:[#allocation10 + $0x58] sm:$0xf]
    %v1268 = vld [vmem:[#allocation10 + $0x5c] sm:$0xf]
    %v1269 = vld [vmem:[#allocation10 + $0x60] sm:$0xf]
    %v1270 = vld [vmem:[#allocation10 + $0x64] sm:$0xf]
    %v1271 = vld [vmem:[#allocation10 + $0x68] sm:$0xf]
    %v1272 = vld [vmem:[#allocation10 + $0x6c] sm:$0xf]
    %v1273 = vld [vmem:[#allocation10 + $0x70] sm:$0xf]
    %v1274 = vld [vmem:[#allocation10 + $0x74] sm:$0xf]
    %v1275 = vld [vmem:[#allocation10 + $0x78] sm:$0xf]
    %v1276 = vld [vmem:[#allocation10 + $0x7c] sm:$0xf]
    %v1277 = vld [vmem:[#allocation10 + $0x80] sm:$0xf]
    %v1278 = vld [vmem:[#allocation10 + $0x84] sm:$0xf]
    %v1279 = vld [vmem:[#allocation10 + $0x88] sm:$0xf]
    %v1280 = vld [vmem:[#allocation10 + $0x8c] sm:$0xf]
    %v1281 = vld [vmem:[#allocation10 + $0x90] sm:$0xf]
    %v1282 = vld [vmem:[#allocation10 + $0x94] sm:$0xf]
    %v1283 = vld [vmem:[#allocation10 + $0x98] sm:$0xf]
    %v1284 = vld [vmem:[#allocation10 + $0x9c] sm:$0xf]
    %v1285 = vld [vmem:[#allocation10 + $0xa0] sm:$0xf]
    %v1286 = vld [vmem:[#allocation10 + $0xa4] sm:$0xf]
    %v1287 = vld [vmem:[#allocation10 + $0xa8] sm:$0xf]
    %v1288 = vld [vmem:[#allocation10 + $0xac] sm:$0xf]
    %v1289 = vld [vmem:[#allocation10 + $0xb0] sm:$0xf]
    %v1290 = vld [vmem:[#allocation10 + $0xb4] sm:$0xf]
    %v1291 = vld [vmem:[#allocation10 + $0xb8] sm:$0xf]
    %v1292 = vld [vmem:[#allocation10 + $0xbc] sm:$0xf]
    %v1293 = vld [vmem:[%s6] sm:$0x1]
    %v1295 = vlaneseq
    %v1296 = vshrl.u32 %v1295, 7
    %v1297 = vsub.s32 0, %v1296
    %v1298 = vrot.slane %v1293, %v1297
    %v1348 = vunpack.c.l.b16 %v1245
    %v1349 = vunpack.c.l.b16 %v1246
    %v1350 = vunpack.c.l.b16 %v1247
    %v1351 = vunpack.c.l.b16 %v1248
    %v1352 = vunpack.c.l.b16 %v1249
    %v1353 = vunpack.c.l.b16 %v1250
    %v1354 = vunpack.c.l.b16 %v1251
    %v1355 = vunpack.c.l.b16 %v1252
    %v1356 = vunpack.c.l.b16 %v1253
    %v1357 = vunpack.c.l.b16 %v1254
    %v1358 = vunpack.c.l.b16 %v1255
    %v1359 = vunpack.c.l.b16 %v1256
    %v1360 = vunpack.c.l.b16 %v1257
    %v1361 = vunpack.c.l.b16 %v1258
    %v1362 = vunpack.c.l.b16 %v1259
    %v1363 = vunpack.c.l.b16 %v1260
    %v1364 = vunpack.c.l.b16 %v1261
    %v1365 = vunpack.c.l.b16 %v1262
    %v1366 = vunpack.c.l.b16 %v1263
    %v1367 = vunpack.c.l.b16 %v1264
    %v1368 = vunpack.c.l.b16 %v1265
    %v1369 = vunpack.c.l.b16 %v1266
    %v1370 = vunpack.c.l.b16 %v1267
    %v1371 = vunpack.c.l.b16 %v1268
    %v1372 = vunpack.c.l.b16 %v1269
    %v1373 = vunpack.c.l.b16 %v1270
    %v1374 = vunpack.c.l.b16 %v1271
    %v1375 = vunpack.c.l.b16 %v1272
    %v1376 = vunpack.c.l.b16 %v1273
    %v1377 = vunpack.c.l.b16 %v1274
    %v1378 = vunpack.c.l.b16 %v1275
    %v1379 = vunpack.c.l.b16 %v1276
    %v1380 = vunpack.c.l.b16 %v1277
    %v1381 = vunpack.c.l.b16 %v1278
    %v1382 = vunpack.c.l.b16 %v1279
    %v1383 = vunpack.c.l.b16 %v1280
    %v1384 = vunpack.c.l.b16 %v1281
    %v1385 = vunpack.c.l.b16 %v1282
    %v1386 = vunpack.c.l.b16 %v1283
    %v1387 = vunpack.c.l.b16 %v1284
    %v1388 = vunpack.c.l.b16 %v1285
    %v1389 = vunpack.c.l.b16 %v1286
    %v1390 = vunpack.c.l.b16 %v1287
    %v1391 = vunpack.c.l.b16 %v1288
    %v1392 = vunpack.c.l.b16 %v1289
    %v1393 = vunpack.c.l.b16 %v1290
    %v1394 = vunpack.c.l.b16 %v1291
    %v1395 = vunpack.c.l.b16 %v1292
    %v1396 = vpack.c.b16 %v1349, %v1348
    %v1397 = vpack.c.b16 %v1351, %v1350
    %v1398 = vpack.c.b16 %v1353, %v1352
    %v1399 = vpack.c.b16 %v1355, %v1354
    %v1400 = vpack.c.b16 %v1357, %v1356
    %v1401 = vpack.c.b16 %v1359, %v1358
    %v1402 = vpack.c.b16 %v1361, %v1360
    %v1403 = vpack.c.b16 %v1363, %v1362
    %v1404 = vpack.c.b16 %v1365, %v1364
    %v1405 = vpack.c.b16 %v1367, %v1366
    %v1406 = vpack.c.b16 %v1369, %v1368
    %v1407 = vpack.c.b16 %v1371, %v1370
    %v1408 = vpack.c.b16 %v1373, %v1372
    %v1409 = vpack.c.b16 %v1375, %v1374
    %v1410 = vpack.c.b16 %v1377, %v1376
    %v1411 = vpack.c.b16 %v1379, %v1378
    %v1412 = vpack.c.b16 %v1381, %v1380
    %v1413 = vpack.c.b16 %v1383, %v1382
    %v1414 = vpack.c.b16 %v1385, %v1384
    %v1415 = vpack.c.b16 %v1387, %v1386
    %v1416 = vpack.c.b16 %v1389, %v1388
    %v1417 = vpack.c.b16 %v1391, %v1390
    %v1418 = vpack.c.b16 %v1393, %v1392
    %v1419 = vpack.c.b16 %v1395, %v1394
    %1444 = vmatprep.subr.bf16.mxu0 0
    %1445 = vmatpush1.bf16.msra.mxu0 %v1403
    %1446 = vmatprep.subr.bf16.mxu0 0
    %1447 = vmatpush1.bf16.msra.mxu0 %v1402
    %1448 = vmatprep.subr.bf16.mxu0 0
    %1449 = vmatpush1.bf16.msra.mxu0 %v1401
    %1450 = vmatprep.subr.bf16.mxu0 0
    %1451 = vmatpush1.bf16.msra.mxu0 %v1400
    %1452 = vmatprep.subr.bf16.mxu0 0
    %1453 = vmatpush1.bf16.msra.mxu0 %v1399
    %1454 = vmatprep.subr.bf16.mxu0 0
    %1455 = vmatpush1.bf16.msra.mxu0 %v1398
    %1456 = vmatprep.subr.bf16.mxu0 0
    %1457 = vmatpush1.bf16.msra.mxu0 %v1397
    %1458 = vmatprep.subr.bf16.mxu0 0
    %1459 = vmatpush1.bf16.msra.mxu0 %v1396
    %1460 = vmatprep.subr.bf16.mxu0 0
    %1461 = vmatpush2.bf16.msra.mxu0 %v1411
    %1462 = vmatprep.subr.bf16.mxu0 0
    %1463 = vmatpush2.bf16.msra.mxu0 %v1410
    %1464 = vmatprep.subr.bf16.mxu0 0
    %1465 = vmatpush2.bf16.msra.mxu0 %v1409
    %1466 = vmatprep.subr.bf16.mxu0 0
    %1467 = vmatpush2.bf16.msra.mxu0 %v1408
    %1468 = vmatprep.subr.bf16.mxu0 0
    %1469 = vmatpush2.bf16.msra.mxu0 %v1407
    %1470 = vmatprep.subr.bf16.mxu0 0
    %1471 = vmatpush2.bf16.msra.mxu0 %v1406
    %1472 = vmatprep.subr.bf16.mxu0 0
    %1473 = vmatpush2.bf16.msra.mxu0 %v1405
    %1474 = vmatprep.subr.bf16.mxu0 0
    %1475 = vmatpush2.bf16.msra.mxu0 %v1404
    %1476 = vmatprep.mubr.bf16.mxu0 %v1243
    %1477 = vmatmul.mubr.bf16.gmra.mxu0 %v1242
    %v1478 = vpop.f32.mrf.mxu0
    %v1479 = vadd.f32 %v1298, %v1478
    %v1480 = vpop.f32.mrf.mxu0
    %v1481 = vpop.f32.mrf.mxu0
    %v1482 = vadd.f32 %v1298, %v1481
    %v1483 = vpop.f32.mrf.mxu0
    %1484 = vdwg.mxu0
    %1485 = vmatprep.subr.bf16.mxu0 0
    %1486 = vmatpush1.bf16.msra.mxu0 %v1419
    %1487 = vmatprep.subr.bf16.mxu0 0
    %1488 = vmatpush1.bf16.msra.mxu0 %v1418
    %1489 = vmatprep.subr.bf16.mxu0 0
    %1490 = vmatpush1.bf16.msra.mxu0 %v1417
    %1491 = vmatprep.subr.bf16.mxu0 0
    %1492 = vmatpush1.bf16.msra.mxu0 %v1416
    %1493 = vmatprep.subr.bf16.mxu0 0
    %1494 = vmatpush1.bf16.msra.mxu0 %v1415
    %1495 = vmatprep.subr.bf16.mxu0 0
    %1496 = vmatpush1.bf16.msra.mxu0 %v1414
    %1497 = vmatprep.subr.bf16.mxu0 0
    %1498 = vmatpush1.bf16.msra.mxu0 %v1413
    %1499 = vmatprep.subr.bf16.mxu0 0
    %1500 = vmatpush1.bf16.msra.mxu0 %v1412
    %1501 = vmatprep.subr.bf16.mxu0 0
    %1502 = vmatpush2.bf16.msra.mxu0 0
    %1503 = vmatprep.subr.bf16.mxu0 0
    %1504 = vmatpush2.bf16.msra.mxu0 0
    %1505 = vmatprep.subr.bf16.mxu0 0
    %1506 = vmatpush2.bf16.msra.mxu0 0
    %1507 = vmatprep.subr.bf16.mxu0 0
    %1508 = vmatpush2.bf16.msra.mxu0 0
    %1509 = vmatprep.subr.bf16.mxu0 0
    %1510 = vmatpush2.bf16.msra.mxu0 0
    %1511 = vmatprep.subr.bf16.mxu0 0
    %1512 = vmatpush2.bf16.msra.mxu0 0
    %1513 = vmatprep.subr.bf16.mxu0 0
    %1514 = vmatpush2.bf16.msra.mxu0 0
    %1515 = vmatprep.subr.bf16.mxu0 0
    %1516 = vmatpush2.bf16.msra.mxu0 0
    %1517 = vmatprep.mubr.bf16.mxu0 0
    %1518 = vmatmul.mubr.bf16.gmra.mxu0 %v1244
    %v1519 = vpop.f32.mrf.mxu0
    %v1520 = vadd.f32 %v1479, %v1519
    %v1521 = vpop.f32.mrf.mxu0
    %v1522 = vpop.f32.mrf.mxu0
    %v1523 = vadd.f32 %v1482, %v1522
    %v1524 = vpop.f32.mrf.mxu0
    %1525 = vdwg.mxu0
    %v1526 = vmul.f32 %v1520, 0.5
    %v1527 = vmul.f32 %v1523, 0.5
    %v1528 = vtanh.pop %v1526
    %v1529 = vtanh.pop %v1527
    %v1530 = vmul.f32 %v1528, 0.5
    %v1531 = vmul.f32 %v1529, 0.5
    %v1532 = vadd.f32 %v1530, 0.5
    %v1533 = vadd.f32 %v1531, 0.5
    %1534 = vst [vmem:[%s7] sm:$0xff] %v1532
    %1535 = vst [vmem:[%s7 + $0x8] sm:$0xff] %v1533
    // Predicated region
    $region50: #{actor_forward.1} parent=1 // pred_check
      _
    $region51: #{actor_forward.1} parent=1 // pred_check_branch
      %1537 = sbr.rel (0) target = $region53
    $region52: #{actor_forward.1} parent=1 // pred_region
      _
    $region53: #{actor_forward.1} parent=1 // pred_fallthru
      _
    // Predicated region
    $region54: #{actor_forward.1} parent=1 // pred_check
      _
    $region55: #{actor_forward.1} parent=1 // pred_check_branch
      %1539 = sbr.rel (0) target = $region57
    $region56: #{actor_forward.1} parent=1 // pred_region
      _
    $region57: #{actor_forward.1} parent=1 // pred_fallthru
      _
    %1540 = vsyncpa [#allocation4], 1
    %1541 = vsyncpa [#allocation6], 1
    %1542 = vsyncpa [#allocation9], 1

</llo_original>
